<compile_context>
chip_gen: v6e
topology: v6e:2x2x1
jax: 0.10.0
libtpu: 0.0.40
codegen_flags: <defaults>
</compile_context>

<pallas_src>
import jax
import jax.numpy as jnp
from jax.experimental import pallas as pl
from jax.experimental.pallas import tpu as pltpu


# ------------------------------------------------------------------ kernel ---
def ode_merge_cell_kernel(x_ref,      # VMEM [tb, d_in]            f32
                          state_ref,  # VMEM [tb, k_out + k_h]     f32
                          w4_ref,     # VMEM [d_in + k_h, 4*k_h]   mm dtype (x rows, then h rows)
                          c_ref,      # VMEM [k_h + k_s + 2, LC]   f32 head weights + biases
                          out_ref):   # VMEM [tb, k_pad]           f32
    d_in = x_ref.shape[1]
    k_s = state_ref.shape[1]           # k_out + k_h
    g_w = w4_ref.shape[1]              # 4 * k_h
    k_h = g_w // 4
    k_out = k_s - k_h
    k_pad = out_ref.shape[1]
    mm = w4_ref.dtype

    state = state_ref[...]             # [tb, k_out + k_h]
    h = state[:, k_out:]               # [tb, k_h]

    # Fused GRU gates: columns = [ r_pre | z_pre | i_n | h_n ].
    b4 = c_ref[k_h + k_s + 1:k_h + k_s + 2, :g_w]
    g = (jnp.dot(x_ref[...].astype(mm), w4_ref[:d_in, :],
                 preferred_element_type=jnp.float32)
         + jnp.dot(h.astype(mm), w4_ref[d_in:, :],
                   preferred_element_type=jnp.float32)
         + b4)
    r = jax.nn.sigmoid(g[:, :k_h])
    z = jax.nn.sigmoid(g[:, k_h:2 * k_h])
    n = jnp.tanh(g[:, 2 * k_h:3 * k_h] + r * g[:, 3 * k_h:4 * k_h])

    # GRUCell + one explicit-Euler step over t = [0.0, 0.1], folded:
    #   h' = h + 0.1*((1-z)*n + z*h - h) = (1 - 0.1*(1-z))*h + 0.1*(1-z)*n
    omz = 1.0 - z
    h_next = (1.0 - 0.1 * omz) * h + (0.1 * omz) * n

    # Fused head (all f32 -> h_next passes through the identity block exactly):
    #   lanes [0, k_out)         : yt*cy + Ly(h_next)*cl + b_ly*cl
    #   lanes [k_out, k_out+k_h) : h_next
    out = (jnp.dot(h_next, c_ref[:k_h, :k_pad],
                   preferred_element_type=jnp.float32)
           + jnp.dot(state, c_ref[k_h:k_h + k_s, :k_pad],
                     preferred_element_type=jnp.float32)
           + c_ref[k_h + k_s:k_h + k_s + 1, :k_pad])
    out_ref[...] = out


# ----------------------------------------------------------------- wrapper ---
def ode_merge_cell_forward(state, xt, dt, params, y_type,
                           *, use_bf16_matmul=True, tb=None):
    """state: [B, k_out+k_h], xt: [B, D_in], dt: scalar -> [B, k_out+k_h]."""
    B = state.shape[0]
    k_out = params["w_ly"].shape[0]
    k_h = params["w_hh"].shape[1]
    d_in = params["w_ih"].shape[1]
    d_xh = d_in + k_h
    k_s = k_out + k_h
    G = 4 * k_h
    k_pad = ((k_s + 127) // 128) * 128      # lane-dense output width
    LC = max(k_pad, G)                      # shared lane width of the f32 constant block

    mm_dtype = jnp.bfloat16 if use_bf16_matmul else jnp.float32

    # ---- one-time constant prep (hoist out of any step loop in real use) -----
    wih_t = params["w_ih"].T.astype(jnp.float32)   # [d_in, 3*k_h]  (r|z|n)
    whh_t = params["w_hh"].T.astype(jnp.float32)   # [k_h , 3*k_h]
    # Fused gate weight, columns [ r_pre | z_pre | i_n | h_n ], rows: x then h.
    w4 = jnp.concatenate([
        jnp.concatenate([wih_t[:, :2 * k_h], wih_t[:, 2 * k_h:],
                         jnp.zeros((d_in, k_h), jnp.float32)], axis=1),
        jnp.concatenate([whh_t[:, :2 * k_h],
                         jnp.zeros((k_h, k_h), jnp.float32),
                         whh_t[:, 2 * k_h:]], axis=1),
    ], axis=0).astype(mm_dtype)                    # [d_xh, 4*k_h]

    bih = params["b_ih"].astype(jnp.float32)
    bhh = params["b_hh"].astype(jnp.float32)
    b4 = jnp.concatenate([bih[:2 * k_h] + bhh[:2 * k_h],
                          bih[2 * k_h:], bhh[2 * k_h:]])          # [4*k_h]

    codes = jnp.asarray(y_type, jnp.int32)
    dt_f = jnp.float32(dt)
    cy = jnp.where(codes == 0, 0.0, jnp.where(codes == 1, 1.0 - dt_f, 1.0))  # [k_out]
    cl = jnp.where(codes == 0, 1.0, dt_f)                                    # [k_out]

    # f32 constant block:
    #   rows [0, k_h)        : W_h = [ w_ly^T * cl | I_{k_h} | 0 ]
    #   rows [k_h, k_h+k_s)  : W_s = [ diag(cy)    | 0 ]    (applied to raw state)
    #   row  k_h+k_s         : b_head = [ b_ly * cl | 0 ]
    #   row  k_h+k_s+1       : b4 (fused GRU gate bias), padded to LC
    w_h_head = jnp.zeros((k_h, LC), jnp.float32)
    w_h_head = w_h_head.at[:, :k_out].set(
        params["w_ly"].T.astype(jnp.float32) * cl[None, :])
    w_h_head = w_h_head.at[:, k_out:k_out + k_h].set(jnp.eye(k_h, dtype=jnp.float32))
    w_s_head = jnp.zeros((k_s, LC), jnp.float32).at[:k_out, :k_out].set(jnp.diag(cy))
    b_head = jnp.zeros((1, LC), jnp.float32).at[0, :k_out].set(
        params["b_ly"].astype(jnp.float32) * cl)
    b4_row = jnp.zeros((1, LC), jnp.float32).at[0, :G].set(b4)
    c_const = jnp.concatenate([w_h_head, w_s_head, b_head, b4_row], axis=0)

    # ---- activations: no splitting / concatenation, just batch tiling --------
    x_in = xt.astype(jnp.float32)
    st_in = state.astype(jnp.float32)

    if tb is None:
        # Big tiles amortize the ~0.35 us/grid-step overhead; cap at ceil(B/2)
        # so the grid keeps >=2 steps (v7x megacore) whenever B allows it.
        half = (B + 1) // 2
        tb = max(8, min(2048, ((half + 7) // 8) * 8))
    else:
        tb = max(8, ((tb + 7) // 8) * 8)
    b_pad = pl.cdiv(B, tb) * tb
    pad = b_pad - B
    if pad:
        x_in = jnp.pad(x_in, ((0, pad), (0, 0)))
        st_in = jnp.pad(st_in, ((0, pad), (0, 0)))

    out = pl.pallas_call(
        ode_merge_cell_kernel,
        out_shape=jax.ShapeDtypeStruct((b_pad, k_pad), jnp.float32),
        grid=(b_pad // tb,),
        in_specs=[
            pl.BlockSpec((tb, d_in), lambda i: (i, 0)),            # xt
            pl.BlockSpec((tb, k_s), lambda i: (i, 0)),             # state (unsplit)
            pl.BlockSpec((d_xh, G), lambda i: (0, 0)),             # fused gate weight
            pl.BlockSpec((k_h + k_s + 2, LC), lambda i: (0, 0)),   # head weights + biases
        ],
        out_specs=pl.BlockSpec((tb, k_pad), lambda i: (i, 0)),
        compiler_params=pltpu.CompilerParams(
            dimension_semantics=("parallel",)),
    )(x_in, st_in, w4, c_const)

    # lanes [0, k_out) = nyt ; lanes [k_out, k_out+k_h) = h' -> already in the
    # module's output order, so a plain slice suffices (no concat/reorder pass).
    return out[:B, :k_s]


# ----------------------------------------------------- pure-JAX reference ---
def ode_merge_cell_reference(state, xt, dt, params, y_type):
    k_out = params["w_ly"].shape[0]
    k_h = params["w_hh"].shape[1]
    yt, ht = state[:, :k_out], state[:, k_out:]

    gi = xt @ params["w_ih"].T + params["b_ih"]
    gh = ht @ params["w_hh"].T + params["b_hh"]
    i_r, i_z, i_n = gi[:, :k_h], gi[:, k_h:2 * k_h], gi[:, 2 * k_h:]
    h_r, h_z, h_n = gh[:, :k_h], gh[:, k_h:2 * k_h], gh[:, 2 * k_h:]
    r = jax.nn.sigmoid(i_r + h_r)
    z = jax.nn.sigmoid(i_z + h_z)
    n = jnp.tanh(i_n + r * h_n)
    h_cell = (1.0 - z) * n + z * ht
    ht_next = ht + 0.1 * (h_cell - ht)

    ly = ht_next @ params["w_ly"].T + params["b_ly"]
    codes = jnp.asarray(y_type, dtype=jnp.float32)[None, :]
    nyt = jnp.where(codes == 0.0, ly,
                    jnp.where(codes == 1.0, yt + (ly - yt) * dt,
                              yt + ly * dt))
    return jnp.concatenate([nyt, ht_next], axis=-1)


# -------------------------------------------------------------------- main ---
if __name__ == "__main__":
    # Module hyper-parameters (small, consistent with __init__).
    k_in, k_expand_in, k_t = 4, 3, 1
    d_in = k_expand_in + k_in + k_t                 # GRUCell input size = 8
    k_h = 32
    k_out = 6
    B = 8
    dt = 0.05
    # y_type = ['d','s','n','d','s','n'] -> codes [0,1,2,0,1,2]
    y_type = [0, 1, 2, 0, 1, 2]

    key = jax.random.PRNGKey(0)
    ks = jax.random.split(key, 8)
    scale = 1.0 / jnp.sqrt(jnp.float32(k_h))
    params = {
        "w_ih": jax.random.uniform(ks[0], (3 * k_h, d_in), jnp.float32, -scale, scale),
        "w_hh": jax.random.uniform(ks[1], (3 * k_h, k_h), jnp.float32, -scale, scale),
        "b_ih": jax.random.uniform(ks[2], (3 * k_h,), jnp.float32, -scale, scale),
        "b_hh": jax.random.uniform(ks[3], (3 * k_h,), jnp.float32, -scale, scale),
        "w_ly": jax.random.uniform(ks[4], (k_out, k_h), jnp.float32, -scale, scale),
        "b_ly": jax.random.uniform(ks[5], (k_out,), jnp.float32, -scale, scale),
    }
    state = jax.random.normal(ks[6], (B, k_out + k_h), jnp.float32)
    xt = jax.random.normal(ks[7], (B, d_in), jnp.float32)

    ref = ode_merge_cell_reference(state, xt, dt, params, y_type)

    # Exact-path check (f32 MXU operands throughout).
    out_f32 = jax.block_until_ready(
        ode_merge_cell_forward(state, xt, dt, params, y_type,
                               use_bf16_matmul=False))
    assert out_f32.shape == (B, k_out + k_h)
    assert jnp.allclose(out_f32, ref, rtol=1e-5, atol=1e-5), "f32 mismatch vs reference"

    # Fast-path check (bf16 gate matmuls, f32 accumulate + f32 head) — default.
    out_bf16 = jax.block_until_ready(
        ode_merge_cell_forward(state, xt, dt, params, y_type,
                               use_bf16_matmul=True))
    assert out_bf16.shape == (B, k_out + k_h)
    assert jnp.allclose(out_bf16, ref, rtol=2e-2, atol=2e-2), "bf16 mismatch vs reference"

    print("KERNEL_OK")
</pallas_src>

<mosaic_0001>
module attributes {stable_mosaic.version = 11 : i64} {
  func.func @ode_merge_cell_kernel(%arg0: i32, %arg1: memref<8x8xf32, #tpu.memory_space<vmem>>, %arg2: memref<8x38xf32, #tpu.memory_space<vmem>>, %arg3: memref<40x128xf32, #tpu.memory_space<vmem>>, %arg4: memref<72x128xf32, #tpu.memory_space<vmem>>, %arg5: memref<8x128xf32, #tpu.memory_space<vmem>>) attributes {dimension_semantics = [#tpu.dimension_semantics<parallel>], iteration_bounds = array<i64: 1>, scalar_prefetch = 0 : i64, scratch_operands = 0 : i64, tpu.core_type = #tpu.core_type<tc>, window_params = [{transform_indices = @transform_0, window_bounds = array<i64: 8, 8>}, {transform_indices = @transform_1, window_bounds = array<i64: 8, 38>}, {pipeline_mode = #tpu.pipeline_mode<synchronous>, transform_indices = @transform_2, window_bounds = array<i64: 40, 128>}, {pipeline_mode = #tpu.pipeline_mode<synchronous>, transform_indices = @transform_3, window_bounds = array<i64: 72, 128>}, {transform_indices = @transform_4, window_bounds = array<i64: 8, 128>}]} {
    %c0 = arith.constant 0 : index
    %c0_0 = arith.constant 0 : index
    %0 = vector.load %arg2[%c0, %c0_0] : memref<8x38xf32, #tpu.memory_space<vmem>>, vector<8x38xf32>
    %1 = vector.extract_strided_slice %0 {offsets = [0, 6], sizes = [8, 32], strides = [1, 1]} : vector<8x38xf32> to vector<8x32xf32>
    %c71 = arith.constant 71 : index
    %c0_1 = arith.constant 0 : index
    %2 = vector.load %arg4[%c71, %c0_1] : memref<72x128xf32, #tpu.memory_space<vmem>>, vector<1x128xf32>
    %c0_2 = arith.constant 0 : index
    %c0_3 = arith.constant 0 : index
    %3 = vector.load %arg1[%c0_2, %c0_3] : memref<8x8xf32, #tpu.memory_space<vmem>>, vector<8x8xf32>
    %c0_4 = arith.constant 0 : index
    %c0_5 = arith.constant 0 : index
    %4 = vector.load %arg3[%c0_4, %c0_5] : memref<40x128xf32, #tpu.memory_space<vmem>>, vector<8x128xf32>
    %cst = arith.constant dense<0.000000e+00> : vector<8x128xf32>
    %5 = tpu.matmul %3, %4, %cst {dimension_numbers = #tpu.dot_dimension_numbers<[1], [0], [0], [1], [0, 0, 1, 1], [], []>} : vector<8x8xf32>, vector<8x128xf32>, vector<8x128xf32> -> vector<8x128xf32>
    %c8 = arith.constant 8 : index
    %c0_6 = arith.constant 0 : index
    %6 = vector.load %arg3[%c8, %c0_6] : memref<40x128xf32, #tpu.memory_space<vmem>>, vector<32x128xf32>
    %cst_7 = arith.constant dense<0.000000e+00> : vector<8x128xf32>
    %7 = tpu.matmul %1, %6, %cst_7 {dimension_numbers = #tpu.dot_dimension_numbers<[1], [0], [0], [1], [0, 0, 1, 1], [], []>} : vector<8x32xf32>, vector<32x128xf32>, vector<8x128xf32> -> vector<8x128xf32>
    %8 = arith.addf %5, %7 : vector<8x128xf32>
    %9 = vector.broadcast %2 : vector<1x128xf32> to vector<8x128xf32>
    %10 = arith.addf %8, %9 : vector<8x128xf32>
    %11 = vector.extract_strided_slice %10 {offsets = [0, 0], sizes = [8, 32], strides = [1, 1]} : vector<8x128xf32> to vector<8x32xf32>
    %12 = arith.negf %11 : vector<8x32xf32>
    %13 = math.exp %12 : vector<8x32xf32>
    %cst_8 = arith.constant 1.000000e+00 : f32
    %14 = vector.broadcast %cst_8 : f32 to vector<8x32xf32>
    %15 = arith.addf %14, %13 : vector<8x32xf32>
    %16 = arith.divf %14, %15 : vector<8x32xf32>
    %17 = vector.extract_strided_slice %10 {offsets = [0, 32], sizes = [8, 32], strides = [1, 1]} : vector<8x128xf32> to vector<8x32xf32>
    %18 = arith.negf %17 : vector<8x32xf32>
    %19 = math.exp %18 : vector<8x32xf32>
    %cst_9 = arith.constant 1.000000e+00 : f32
    %20 = vector.broadcast %cst_9 : f32 to vector<8x32xf32>
    %21 = arith.addf %20, %19 : vector<8x32xf32>
    %22 = arith.divf %20, %21 : vector<8x32xf32>
    %23 = vector.extract_strided_slice %10 {offsets = [0, 64], sizes = [8, 32], strides = [1, 1]} : vector<8x128xf32> to vector<8x32xf32>
    %24 = vector.extract_strided_slice %10 {offsets = [0, 96], sizes = [8, 32], strides = [1, 1]} : vector<8x128xf32> to vector<8x32xf32>
    %25 = arith.mulf %16, %24 : vector<8x32xf32>
    %26 = arith.addf %23, %25 : vector<8x32xf32>
    %27 = math.tanh %26 : vector<8x32xf32>
    %cst_10 = arith.constant 1.000000e+00 : f32
    %28 = vector.broadcast %cst_10 : f32 to vector<8x32xf32>
    %29 = arith.subf %28, %22 : vector<8x32xf32>
    %cst_11 = arith.constant 1.000000e-01 : f32
    %30 = vector.broadcast %cst_11 : f32 to vector<8x32xf32>
    %31 = arith.mulf %30, %29 : vector<8x32xf32>
    %cst_12 = arith.constant 1.000000e+00 : f32
    %32 = vector.broadcast %cst_12 : f32 to vector<8x32xf32>
    %33 = arith.subf %32, %31 : vector<8x32xf32>
    %34 = arith.mulf %33, %1 : vector<8x32xf32>
    %cst_13 = arith.constant 1.000000e-01 : f32
    %35 = vector.broadcast %cst_13 : f32 to vector<8x32xf32>
    %36 = arith.mulf %35, %29 : vector<8x32xf32>
    %37 = arith.mulf %36, %27 : vector<8x32xf32>
    %38 = arith.addf %34, %37 : vector<8x32xf32>
    %c0_14 = arith.constant 0 : index
    %c0_15 = arith.constant 0 : index
    %39 = vector.load %arg4[%c0_14, %c0_15] : memref<72x128xf32, #tpu.memory_space<vmem>>, vector<32x128xf32>
    %cst_16 = arith.constant dense<0.000000e+00> : vector<8x128xf32>
    %40 = tpu.matmul %38, %39, %cst_16 {dimension_numbers = #tpu.dot_dimension_numbers<[1], [0], [0], [1], [0, 0, 1, 1], [], []>} : vector<8x32xf32>, vector<32x128xf32>, vector<8x128xf32> -> vector<8x128xf32>
    %c32 = arith.constant 32 : index
    %c0_17 = arith.constant 0 : index
    %41 = vector.load %arg4[%c32, %c0_17] : memref<72x128xf32, #tpu.memory_space<vmem>>, vector<38x128xf32>
    %cst_18 = arith.constant dense<0.000000e+00> : vector<8x128xf32>
    %42 = tpu.matmul %0, %41, %cst_18 {dimension_numbers = #tpu.dot_dimension_numbers<[1], [0], [0], [1], [0, 0, 1, 1], [], []>} : vector<8x38xf32>, vector<38x128xf32>, vector<8x128xf32> -> vector<8x128xf32>
    %43 = arith.addf %40, %42 : vector<8x128xf32>
    %c70 = arith.constant 70 : index
    %c0_19 = arith.constant 0 : index
    %44 = vector.load %arg4[%c70, %c0_19] : memref<72x128xf32, #tpu.memory_space<vmem>>, vector<1x128xf32>
    %45 = vector.broadcast %44 : vector<1x128xf32> to vector<8x128xf32>
    %46 = arith.addf %43, %45 : vector<8x128xf32>
    %c0_20 = arith.constant 0 : index
    %c0_21 = arith.constant 0 : index
    %47 = vector.load %arg5[%c0_20, %c0_21] : memref<8x128xf32, #tpu.memory_space<vmem>>, vector<8x128xf32>
    tpu.vector_store %arg5[%c0_20, %c0_21], %46 {strides = array<i32>} : memref<8x128xf32, #tpu.memory_space<vmem>>, vector<8x128xf32>,
    return
  }
  func.func @transform_0(%arg0: i32) -> (i32, i32) {
    %c0_i32 = arith.constant 0 : i32
    %c0_i32_0 = arith.constant 0 : i32
    return %arg0, %c0_i32 : i32, i32
  }
  func.func @transform_1(%arg0: i32) -> (i32, i32) {
    %c0_i32 = arith.constant 0 : i32
    %c0_i32_0 = arith.constant 0 : i32
    return %arg0, %c0_i32 : i32, i32
  }
  func.func @transform_2(%arg0: i32) -> (i32, i32) {
    %c0_i32 = arith.constant 0 : i32
    %c0_i32_0 = arith.constant 0 : i32
    %c0_i32_1 = arith.constant 0 : i32
    return %c0_i32, %c0_i32_0 : i32, i32
  }
  func.func @transform_3(%arg0: i32) -> (i32, i32) {
    %c0_i32 = arith.constant 0 : i32
    %c0_i32_0 = arith.constant 0 : i32
    %c0_i32_1 = arith.constant 0 : i32
    return %c0_i32, %c0_i32_0 : i32, i32
  }
  func.func @transform_4(%arg0: i32) -> (i32, i32) {
    %c0_i32 = arith.constant 0 : i32
    %c0_i32_0 = arith.constant 0 : i32
    return %arg0, %c0_i32 : i32, i32
  }
}

</mosaic_0001>

<llo_original>
// kernel: tpu_custom_call.1
$region0: #{tpu_custom_call.1}
  #allocation0 [shape = 'u32[]', space=smem, size = 0x4, offset = 0x4, fixed_abs, tag = 'smem constant byte address 0x4 - core index']
  #allocation1 [shape = 'u32[144,128]{1,0:T(1,128)}', space=vmem, size = 0x12000, scoped, tag = 'internal scratch']
  %s0 = inlined_call_operand.hbm [shape: f32[8,8], index: 0, kind: input, shape index: {}]
  %s1 = inlined_call_operand.hbm [shape: f32[8,38], index: 1, kind: input, shape index: {}]
  %s2 = inlined_call_operand.hbm [shape: f32[40,128], index: 2, kind: input, shape index: {}]
  %s3 = inlined_call_operand.hbm [shape: f32[72,128], index: 3, kind: input, shape index: {}]
  %s4 = inlined_call_operand.hbm [shape: f32[8,128], index: 4, kind: output, shape index: {}]
  %s5 = sld [smem:[#allocation0]]
  $region42: #{tpu_custom_call.1} parent=0
    _
  %s7 = ssub.s32 1, %s5
  %s8 = scalar_select 0, %s7, %s5
  $region1: #{tpu_custom_call.1} parent=0
    #allocation2 [shape = 'u8[4096]{0}', space=vmem, size = 0x1000, scoped, tag = 'input window, operand 0, single buffered']
    #allocation3 [shape = 's32[1]{0}', space=sflag, size = 0x4, scoped, tag = 'scoped memory for tpu_custom_call.1']
    #allocation4 [shape = 's32[1]{0}', space=sflag, size = 0x4, scoped, tag = 'scoped memory for tpu_custom_call.1']
    #allocation5 [shape = 'u8[4096]{0}', space=vmem, size = 0x1000, scoped, tag = 'input window, operand 1, single buffered']
    #allocation6 [shape = 's32[1]{0}', space=sflag, size = 0x4, scoped, tag = 'scoped memory for tpu_custom_call.1']
    #allocation7 [shape = 'u8[20480]{0}', space=vmem, size = 0x5000, scoped, tag = 'input window, operand 2, single buffered']
    #allocation8 [shape = 'u8[36864]{0}', space=vmem, size = 0x9000, scoped, tag = 'input window, operand 3, single buffered']
    #allocation9 [shape = 's32[1]{0}', space=sflag, size = 0x4, scoped, tag = 'scoped memory for tpu_custom_call.1']
    #allocation10 [shape = 'u8[4096]{0}', space=vmem, size = 0x1000, scoped, tag = 'output window, operand 0, single buffered']
    %9 = vsyncpa [#allocation3], 0
    %10 = vsyncpa [#allocation6], 0
    %11 = vsyncpa [#allocation9], 0
    %12 = vsyncpa [#allocation4], 0
    // Predicated region
    $region2: #{tpu_custom_call.1} parent=1 // pred_check
      _
    $region3: #{tpu_custom_call.1} parent=1 // pred_check_branch
      %14 = sbr.rel (0) target = $region5
    $region4: #{tpu_custom_call.1} parent=1 // pred_region
      %s16 = ssub.s32 128, 128
      %17 = vsyncadd [#allocation3], %s16
      %s19 = sshll.u32 [#allocation2], 4
      %s20 = int_to_ptr.vmem [resolvable:$true] %s19
      %22 = dma.hbm_to_vmem [thread:$0]  %s0, 128, %s20, [#allocation3]
    $region5: #{tpu_custom_call.1} parent=1 // pred_fallthru
      _
    // Predicated region
    $region6: #{tpu_custom_call.1} parent=1 // pred_check
      _
    $region7: #{tpu_custom_call.1} parent=1 // pred_check_branch
      %24 = sbr.rel (0) target = $region9
    $region8: #{tpu_custom_call.1} parent=1 // pred_region
      %s26 = ssub.s32 128, 128
      %27 = vsyncadd [#allocation6], %s26
      %s29 = sshll.u32 [#allocation5], 4
      %s30 = int_to_ptr.vmem [resolvable:$true] %s29
      %32 = dma.hbm_to_vmem [thread:$0]  %s1, 128, %s30, [#allocation6]
    $region9: #{tpu_custom_call.1} parent=1 // pred_fallthru
      _
    // Predicated region
    $region10: #{tpu_custom_call.1} parent=1 // pred_check
      _
    $region11: #{tpu_custom_call.1} parent=1 // pred_check_branch
      %34 = sbr.rel (0) target = $region13
    $region12: #{tpu_custom_call.1} parent=1 // pred_region
      %s36 = ssub.s32 640, 640
      %37 = vsyncadd [#allocation6], %s36
      %s38 = sshll.u32 [#allocation7], 4
      %s39 = int_to_ptr.vmem [resolvable:$true] %s38
      %44 = dma.hbm_to_vmem [thread:$0]  %s2, 640, %s39, [#allocation6], 128, 128, 8
    $region13: #{tpu_custom_call.1} parent=1 // pred_fallthru
      _
    // Predicated region
    $region14: #{tpu_custom_call.1} parent=1 // pred_check
      _
    $region15: #{tpu_custom_call.1} parent=1 // pred_check_branch
      %46 = sbr.rel (0) target = $region17
    $region16: #{tpu_custom_call.1} parent=1 // pred_region
      %s48 = ssub.s32 1152, 1152
      %49 = vsyncadd [#allocation9], %s48
      %s50 = sshll.u32 [#allocation8], 4
      %s51 = int_to_ptr.vmem [resolvable:$true] %s50
      %56 = dma.hbm_to_vmem [thread:$0]  %s3, 1152, %s51, [#allocation9], 128, 128, 8
    $region17: #{tpu_custom_call.1} parent=1 // pred_fallthru
      _
    // Predicated region
    $region18: #{tpu_custom_call.1} parent=1 // pred_check
      _
    $region19: #{tpu_custom_call.1} parent=1 // pred_check_branch
      %58 = sbr.rel (0) target = $region21
    $region20: #{tpu_custom_call.1} parent=1 // pred_region
      %59 = dma.done [#allocation3], 128
    $region21: #{tpu_custom_call.1} parent=1 // pred_fallthru
      _
    // Predicated region
    $region22: #{tpu_custom_call.1} parent=1 // pred_check
      _
    $region23: #{tpu_custom_call.1} parent=1 // pred_check_branch
      %61 = sbr.rel (0) target = $region25
    $region24: #{tpu_custom_call.1} parent=1 // pred_region
      %62 = dma.done [#allocation6], 128
    $region25: #{tpu_custom_call.1} parent=1 // pred_fallthru
      _
    // Predicated region
    $region26: #{tpu_custom_call.1} parent=1 // pred_check
      _
    $region27: #{tpu_custom_call.1} parent=1 // pred_check_branch
      %64 = sbr.rel (0) target = $region29
    $region28: #{tpu_custom_call.1} parent=1 // pred_region
      %65 = dma.done [#allocation6], 640
    $region29: #{tpu_custom_call.1} parent=1 // pred_fallthru
      _
    // Predicated region
    $region30: #{tpu_custom_call.1} parent=1 // pred_check
      _
    $region31: #{tpu_custom_call.1} parent=1 // pred_check_branch
      %67 = sbr.rel (0) target = $region33
    $region32: #{tpu_custom_call.1} parent=1 // pred_region
      %68 = dma.done [#allocation9], 1152
    $region33: #{tpu_custom_call.1} parent=1 // pred_fallthru
      _
    %v69 = vld [vmem:[#allocation5] sm:$0xff]
    %v70 = vld [vmem:[#allocation8 + $0x47] sm:$0x1]
    %v71 = vld [vmem:[#allocation2] sm:$0xff]
    %v72 = vld [vmem:[#allocation7] sm:$0xff]
    %v73 = vld [vmem:[#allocation7 + $0x8] sm:$0xff]
    %v74 = vld [vmem:[#allocation7 + $0x10] sm:$0xff]
    %v75 = vld [vmem:[#allocation7 + $0x18] sm:$0xff]
    %v76 = vld [vmem:[#allocation7 + $0x20] sm:$0xff]
    %78 = vrot.lane.b32.xlu0 %v69, 122
    %v79 = vpop.permute.xlu0 %78
    %vm80 = vcmask 261120
    %v81 = vsel %vm80, %v79, 0
    %83 = vmatprep.subr.mxu0 0.0
    %84 = vmatpush1.msra.mxu0 0.0
    %85 = vmatprep.subr.mxu0 0.0
    %86 = vmatpush1.msra.mxu0 0.0
    %87 = vmatprep.subr.mxu0 0.0
    %88 = vmatpush1.msra.mxu0 0.0
    %89 = vmatprep.subr.mxu0 0.0
    %90 = vmatpush1.msra.mxu0 0.0
    %91 = vmatprep.subr.mxu0 0.0
    %92 = vmatpush1.msra.mxu0 0.0
    %93 = vmatprep.subr.mxu0 0.0
    %94 = vmatpush1.msra.mxu0 0.0
    %95 = vmatprep.subr.mxu0 0.0
    %96 = vmatpush1.msra.mxu0 0.0
    %97 = vmatprep.subr.mxu0 0.0
    %98 = vmatpush1.msra.mxu0 0.0
    %99 = vmatprep.subr.mxu0 0.0
    %100 = vmatpush1.msra.mxu0 0.0
    %101 = vmatprep.subr.mxu0 0.0
    %102 = vmatpush1.msra.mxu0 0.0
    %103 = vmatprep.subr.mxu0 0.0
    %104 = vmatpush1.msra.mxu0 0.0
    %105 = vmatprep.subr.mxu0 0.0
    %106 = vmatpush1.msra.mxu0 0.0
    %107 = vmatprep.subr.mxu0 0.0
    %108 = vmatpush1.msra.mxu0 %v76
    %109 = vmatprep.subr.mxu0 0.0
    %110 = vmatpush1.msra.mxu0 %v75
    %111 = vmatprep.subr.mxu0 0.0
    %112 = vmatpush1.msra.mxu0 %v74
    %113 = vmatprep.subr.mxu0 0.0
    %114 = vmatpush1.msra.mxu0 %v73
    %115 = vmatprep.subr.mxu0 0.0
    %116 = vmatpush2.msra.mxu0 0.0
    %117 = vmatprep.subr.mxu0 0.0
    %118 = vmatpush2.msra.mxu0 0.0
    %119 = vmatprep.subr.mxu0 0.0
    %120 = vmatpush2.msra.mxu0 0.0
    %121 = vmatprep.subr.mxu0 0.0
    %122 = vmatpush2.msra.mxu0 0.0
    %123 = vmatprep.subr.mxu0 0.0
    %124 = vmatpush2.msra.mxu0 0.0
    %125 = vmatprep.subr.mxu0 0.0
    %126 = vmatpush2.msra.mxu0 0.0
    %127 = vmatprep.subr.mxu0 0.0
    %128 = vmatpush2.msra.mxu0 0.0
    %129 = vmatprep.subr.mxu0 0.0
    %130 = vmatpush2.msra.mxu0 0.0
    %131 = vmatprep.subr.mxu0 0.0
    %132 = vmatpush2.msra.mxu0 0.0
    %133 = vmatprep.subr.mxu0 0.0
    %134 = vmatpush2.msra.mxu0 0.0
    %135 = vmatprep.subr.mxu0 0.0
    %136 = vmatpush2.msra.mxu0 0.0
    %137 = vmatprep.subr.mxu0 0.0
    %138 = vmatpush2.msra.mxu0 0.0
    %139 = vmatprep.subr.mxu0 0.0
    %140 = vmatpush2.msra.mxu0 0.0
    %141 = vmatprep.subr.mxu0 0.0
    %142 = vmatpush2.msra.mxu0 0.0
    %143 = vmatprep.subr.mxu0 0.0
    %144 = vmatpush2.msra.mxu0 0.0
    %145 = vmatprep.subr.mxu0 0.0
    %146 = vmatpush2.msra.mxu0 0.0
    %147 = vmatprep.mubr.f32.mxu0 0.0
    %148 = vmatmul.mubr.f32.gmra.mxu0 %v81
    %v149 = vpop.f32.mrf.mxu0
    %v150 = vadd.f32 0.0, %v149
    %v151 = vpop.f32.mrf.mxu0
    %152 = vdwg.mxu0
    %vm153 = vcmask 64512
    %v155 = vsel %vm153, %v71, 0
    %157 = vmatprep.subr.mxu0 0.0
    %158 = vmatpush1.msra.mxu0 0.0
    %159 = vmatprep.subr.mxu0 0.0
    %160 = vmatpush1.msra.mxu0 0.0
    %161 = vmatprep.subr.mxu0 0.0
    %162 = vmatpush1.msra.mxu0 0.0
    %163 = vmatprep.subr.mxu0 0.0
    %164 = vmatpush1.msra.mxu0 0.0
    %165 = vmatprep.subr.mxu0 0.0
    %166 = vmatpush1.msra.mxu0 0.0
    %167 = vmatprep.subr.mxu0 0.0
    %168 = vmatpush1.msra.mxu0 0.0
    %169 = vmatprep.subr.mxu0 0.0
    %170 = vmatpush1.msra.mxu0 0.0
    %171 = vmatprep.subr.mxu0 0.0
    %172 = vmatpush1.msra.mxu0 0.0
    %173 = vmatprep.subr.mxu0 0.0
    %174 = vmatpush1.msra.mxu0 0.0
    %175 = vmatprep.subr.mxu0 0.0
    %176 = vmatpush1.msra.mxu0 0.0
    %177 = vmatprep.subr.mxu0 0.0
    %178 = vmatpush1.msra.mxu0 0.0
    %179 = vmatprep.subr.mxu0 0.0
    %180 = vmatpush1.msra.mxu0 0.0
    %181 = vmatprep.subr.mxu0 0.0
    %182 = vmatpush1.msra.mxu0 0.0
    %183 = vmatprep.subr.mxu0 0.0
    %184 = vmatpush1.msra.mxu0 0.0
    %185 = vmatprep.subr.mxu0 0.0
    %186 = vmatpush1.msra.mxu0 0.0
    %187 = vmatprep.subr.mxu0 0.0
    %188 = vmatpush1.msra.mxu0 %v72
    %189 = vmatprep.subr.mxu0 0.0
    %190 = vmatpush2.msra.mxu0 0.0
    %191 = vmatprep.subr.mxu0 0.0
    %192 = vmatpush2.msra.mxu0 0.0
    %193 = vmatprep.subr.mxu0 0.0
    %194 = vmatpush2.msra.mxu0 0.0
    %195 = vmatprep.subr.mxu0 0.0
    %196 = vmatpush2.msra.mxu0 0.0
    %197 = vmatprep.subr.mxu0 0.0
    %198 = vmatpush2.msra.mxu0 0.0
    %199 = vmatprep.subr.mxu0 0.0
    %200 = vmatpush2.msra.mxu0 0.0
    %201 = vmatprep.subr.mxu0 0.0
    %202 = vmatpush2.msra.mxu0 0.0
    %203 = vmatprep.subr.mxu0 0.0
    %204 = vmatpush2.msra.mxu0 0.0
    %205 = vmatprep.subr.mxu0 0.0
    %206 = vmatpush2.msra.mxu0 0.0
    %207 = vmatprep.subr.mxu0 0.0
    %208 = vmatpush2.msra.mxu0 0.0
    %209 = vmatprep.subr.mxu0 0.0
    %210 = vmatpush2.msra.mxu0 0.0
    %211 = vmatprep.subr.mxu0 0.0
    %212 = vmatpush2.msra.mxu0 0.0
    %213 = vmatprep.subr.mxu0 0.0
    %214 = vmatpush2.msra.mxu0 0.0
    %215 = vmatprep.subr.mxu0 0.0
    %216 = vmatpush2.msra.mxu0 0.0
    %217 = vmatprep.subr.mxu0 0.0
    %218 = vmatpush2.msra.mxu0 0.0
    %219 = vmatprep.subr.mxu0 0.0
    %220 = vmatpush2.msra.mxu0 0.0
    %221 = vmatprep.mubr.f32.mxu0 0.0
    %222 = vmatmul.mubr.f32.gmra.mxu0 %v155
    %v223 = vpop.f32.mrf.mxu0
    %v224 = vadd.f32 %v150, %v223
    %v225 = vpop.f32.mrf.mxu0
    %226 = vdwg.mxu0
    %v227 = vlaneseq
    %v228 = vshrl.u32 %v227, 7
    %v229 = vsub.s32 0, %v228
    %v230 = vrot.slane %v70, %v229
    %v231 = vadd.f32 %v224, %v230
    %v232 = vxor.u32 %v231, 2147483648
    %v233 = vmul.f32 %v232, 1.442695
    %v234 = vpow.pop %v233
    %v235 = vadd.f32 %v234, 1.0
    %v236 = vrcp.pop %v235
    %v237 = vmul.f32 1.0, %v236
    %239 = vrot.lane.b32.xlu0 %v231, 32
    %v240 = vpop.permute.xlu0 %239
    %v242 = vmul.f32 %v237, %v240
    %244 = vrot.lane.b32.xlu0 %v242, 64
    %v245 = vpop.permute.xlu0 %244
    %v247 = vadd.f32 %v231, %v245
    %v248 = vtanh.pop %v247
    %v249 = vsub.f32 1.0, %v237
    %v250 = vmul.f32 %v249, 0.1
    %v251 = vsub.f32 1.0, %v250
    %252 = vrot.lane.b32.xlu0 %v69, 26
    %v253 = vpop.permute.xlu0 %252
    %v255 = vmul.f32 %v251, %v253
    %257 = vrot.lane.b32.xlu0 %v248, 96
    %v258 = vpop.permute.xlu0 %257
    %v260 = vmul.f32 %v250, %v258
    %v261 = vadd.f32 %v255, %v260
    %v262 = vld [vmem:[#allocation8] sm:$0xff]
    %v263 = vld [vmem:[#allocation8 + $0x8] sm:$0xff]
    %v264 = vld [vmem:[#allocation8 + $0x10] sm:$0xff]
    %v265 = vld [vmem:[#allocation8 + $0x18] sm:$0xff]
    %v266 = vld [vmem:[#allocation8 + $0x20] sm:$0xff]
    %v267 = vld [vmem:[#allocation8 + $0x28] sm:$0xff]
    %v268 = vld [vmem:[#allocation8 + $0x30] sm:$0xff]
    %v269 = vld [vmem:[#allocation8 + $0x38] sm:$0xff]
    %v270 = vld [vmem:[#allocation8 + $0x40] sm:$0x3f]
    %vm271 = vcmask 310272
    %v272 = vsel %vm271, %v69, 0
    %vm274 = vcmask 1045504
    %v276 = vsel %vm274, %v270, 0
    %278 = vmatprep.subr.mxu0 0.0
    %279 = vmatpush1.msra.mxu0 0.0
    %280 = vmatprep.subr.mxu0 0.0
    %281 = vmatpush1.msra.mxu0 0.0
    %282 = vmatprep.subr.mxu0 0.0
    %283 = vmatpush1.msra.mxu0 0.0
    %284 = vmatprep.subr.mxu0 0.0
    %285 = vmatpush1.msra.mxu0 0.0
    %286 = vmatprep.subr.mxu0 0.0
    %287 = vmatpush1.msra.mxu0 0.0
    %288 = vmatprep.subr.mxu0 0.0
    %289 = vmatpush1.msra.mxu0 0.0
    %290 = vmatprep.subr.mxu0 0.0
    %291 = vmatpush1.msra.mxu0 0.0
    %292 = vmatprep.subr.mxu0 0.0
    %293 = vmatpush1.msra.mxu0 0.0
    %294 = vmatprep.subr.mxu0 0.0
    %295 = vmatpush1.msra.mxu0 0.0
    %296 = vmatprep.subr.mxu0 0.0
    %297 = vmatpush1.msra.mxu0 0.0
    %298 = vmatprep.subr.mxu0 0.0
    %299 = vmatpush1.msra.mxu0 0.0
    %300 = vmatprep.subr.mxu0 0.0
    %301 = vmatpush1.msra.mxu0 %v276
    %302 = vmatprep.subr.mxu0 0.0
    %303 = vmatpush1.msra.mxu0 %v269
    %304 = vmatprep.subr.mxu0 0.0
    %305 = vmatpush1.msra.mxu0 %v268
    %306 = vmatprep.subr.mxu0 0.0
    %307 = vmatpush1.msra.mxu0 %v267
    %308 = vmatprep.subr.mxu0 0.0
    %309 = vmatpush1.msra.mxu0 %v266
    %310 = vmatprep.subr.mxu0 0.0
    %311 = vmatpush2.msra.mxu0 0.0
    %312 = vmatprep.subr.mxu0 0.0
    %313 = vmatpush2.msra.mxu0 0.0
    %314 = vmatprep.subr.mxu0 0.0
    %315 = vmatpush2.msra.mxu0 0.0
    %316 = vmatprep.subr.mxu0 0.0
    %317 = vmatpush2.msra.mxu0 0.0
    %318 = vmatprep.subr.mxu0 0.0
    %319 = vmatpush2.msra.mxu0 0.0
    %320 = vmatprep.subr.mxu0 0.0
    %321 = vmatpush2.msra.mxu0 0.0
    %322 = vmatprep.subr.mxu0 0.0
    %323 = vmatpush2.msra.mxu0 0.0
    %324 = vmatprep.subr.mxu0 0.0
    %325 = vmatpush2.msra.mxu0 0.0
    %326 = vmatprep.subr.mxu0 0.0
    %327 = vmatpush2.msra.mxu0 0.0
    %328 = vmatprep.subr.mxu0 0.0
    %329 = vmatpush2.msra.mxu0 0.0
    %330 = vmatprep.subr.mxu0 0.0
    %331 = vmatpush2.msra.mxu0 0.0
    %332 = vmatprep.subr.mxu0 0.0
    %333 = vmatpush2.msra.mxu0 0.0
    %334 = vmatprep.subr.mxu0 0.0
    %335 = vmatpush2.msra.mxu0 0.0
    %336 = vmatprep.subr.mxu0 0.0
    %337 = vmatpush2.msra.mxu0 0.0
    %338 = vmatprep.subr.mxu0 0.0
    %339 = vmatpush2.msra.mxu0 0.0
    %340 = vmatprep.subr.mxu0 0.0
    %341 = vmatpush2.msra.mxu0 0.0
    %342 = vmatprep.mubr.f32.mxu0 0.0
    %343 = vmatmul.mubr.f32.gmra.mxu0 %v272
    %v344 = vpop.f32.mrf.mxu0
    %v345 = vadd.f32 0.0, %v344
    %v346 = vpop.f32.mrf.mxu0
    %347 = vdwg.mxu0
    %349 = vrot.lane.b32.xlu0 %v261, 96
    %v350 = vpop.permute.xlu0 %349
    %v351 = vsel %vm80, %v350, 0
    %353 = vmatprep.subr.mxu0 0.0
    %354 = vmatpush1.msra.mxu0 0.0
    %355 = vmatprep.subr.mxu0 0.0
    %356 = vmatpush1.msra.mxu0 0.0
    %357 = vmatprep.subr.mxu0 0.0
    %358 = vmatpush1.msra.mxu0 0.0
    %359 = vmatprep.subr.mxu0 0.0
    %360 = vmatpush1.msra.mxu0 0.0
    %361 = vmatprep.subr.mxu0 0.0
    %362 = vmatpush1.msra.mxu0 0.0
    %363 = vmatprep.subr.mxu0 0.0
    %364 = vmatpush1.msra.mxu0 0.0
    %365 = vmatprep.subr.mxu0 0.0
    %366 = vmatpush1.msra.mxu0 0.0
    %367 = vmatprep.subr.mxu0 0.0
    %368 = vmatpush1.msra.mxu0 0.0
    %369 = vmatprep.subr.mxu0 0.0
    %370 = vmatpush1.msra.mxu0 0.0
    %371 = vmatprep.subr.mxu0 0.0
    %372 = vmatpush1.msra.mxu0 0.0
    %373 = vmatprep.subr.mxu0 0.0
    %374 = vmatpush1.msra.mxu0 0.0
    %375 = vmatprep.subr.mxu0 0.0
    %376 = vmatpush1.msra.mxu0 0.0
    %377 = vmatprep.subr.mxu0 0.0
    %378 = vmatpush1.msra.mxu0 %v265
    %379 = vmatprep.subr.mxu0 0.0
    %380 = vmatpush1.msra.mxu0 %v264
    %381 = vmatprep.subr.mxu0 0.0
    %382 = vmatpush1.msra.mxu0 %v263
    %383 = vmatprep.subr.mxu0 0.0
    %384 = vmatpush1.msra.mxu0 %v262
    %385 = vmatprep.subr.mxu0 0.0
    %386 = vmatpush2.msra.mxu0 0.0
    %387 = vmatprep.subr.mxu0 0.0
    %388 = vmatpush2.msra.mxu0 0.0
    %389 = vmatprep.subr.mxu0 0.0
    %390 = vmatpush2.msra.mxu0 0.0
    %391 = vmatprep.subr.mxu0 0.0
    %392 = vmatpush2.msra.mxu0 0.0
    %393 = vmatprep.subr.mxu0 0.0
    %394 = vmatpush2.msra.mxu0 0.0
    %395 = vmatprep.subr.mxu0 0.0
    %396 = vmatpush2.msra.mxu0 0.0
    %397 = vmatprep.subr.mxu0 0.0
    %398 = vmatpush2.msra.mxu0 0.0
    %399 = vmatprep.subr.mxu0 0.0
    %400 = vmatpush2.msra.mxu0 0.0
    %401 = vmatprep.subr.mxu0 0.0
    %402 = vmatpush2.msra.mxu0 0.0
    %403 = vmatprep.subr.mxu0 0.0
    %404 = vmatpush2.msra.mxu0 0.0
    %405 = vmatprep.subr.mxu0 0.0
    %406 = vmatpush2.msra.mxu0 0.0
    %407 = vmatprep.subr.mxu0 0.0
    %408 = vmatpush2.msra.mxu0 0.0
    %409 = vmatprep.subr.mxu0 0.0
    %410 = vmatpush2.msra.mxu0 0.0
    %411 = vmatprep.subr.mxu0 0.0
    %412 = vmatpush2.msra.mxu0 0.0
    %413 = vmatprep.subr.mxu0 0.0
    %414 = vmatpush2.msra.mxu0 0.0
    %415 = vmatprep.subr.mxu0 0.0
    %416 = vmatpush2.msra.mxu0 0.0
    %417 = vmatprep.mubr.f32.mxu0 0.0
    %418 = vmatmul.mubr.f32.gmra.mxu0 %v351
    %v419 = vpop.f32.mrf.mxu0
    %v420 = vadd.f32 %v345, %v419
    %v421 = vpop.f32.mrf.mxu0
    %422 = vdwg.mxu0
    %v423 = vld [vmem:[#allocation8 + $0x46] sm:$0x1]
    %v424 = vlaneseq
    %v425 = vshrl.u32 %v424, 7
    %v426 = vsub.s32 0, %v425
    %v427 = vrot.slane %v423, %v426
    %v428 = vadd.f32 %v420, %v427
    %429 = vst [vmem:[#allocation10] sm:$0xff] %v428
    // Predicated region
    $region34: #{tpu_custom_call.1} parent=1 // pred_check
      _
    $region35: #{tpu_custom_call.1} parent=1 // pred_check_branch
      %431 = sbr.rel (0) target = $region37
    $region36: #{tpu_custom_call.1} parent=1 // pred_region
      %s433 = ssub.s32 128, 128
      %434 = vsyncadd [#allocation4], %s433
      %s436 = sshll.u32 [#allocation10], 4
      %s437 = int_to_ptr.vmem [resolvable:$true] %s436
      %439 = dma.vmem_to_hbm [thread:$0]  %s437, 128, %s4, [#allocation4]
    $region37: #{tpu_custom_call.1} parent=1 // pred_fallthru
      _
    // Predicated region
    $region38: #{tpu_custom_call.1} parent=1 // pred_check
      _
    $region39: #{tpu_custom_call.1} parent=1 // pred_check_branch
      %441 = sbr.rel (0) target = $region41
    $region40: #{tpu_custom_call.1} parent=1 // pred_region
      %442 = dma.done [#allocation4], 128
    $region41: #{tpu_custom_call.1} parent=1 // pred_fallthru
      _
    %443 = vsyncpa [#allocation3], 1
    %444 = vsyncpa [#allocation6], 1
    %445 = vsyncpa [#allocation9], 1
    %446 = vsyncpa [#allocation4], 1

</llo_original>
